<compile_context>
chip_gen: v6e
topology: v6e:2x2x1
jax: 0.10.0
libtpu: 0.0.40
codegen_flags: <defaults>
</compile_context>

<pallas_src>
import functools
import math

import jax
import jax.numpy as jnp
from jax.experimental import pallas as pl
from jax.experimental.pallas import tpu as pltpu

NEG_SLOPE = 0.01      # F.leaky_relu default
MASK_NEG = -1e30      # finite stand-in for -inf (avoids inf-inf = NaN in online softmax)


def _round_up(x, m):
    return ((x + m - 1) // m) * m


# -----------------------------------------------------------------------------
# Kernel A: fused projection
#   z = x @ W_all  ,  e_dst = z @ A_dst  ,  e_src = z @ A_src   (all heads at once)
# -----------------------------------------------------------------------------
def _proj_kernel(x_ref, w_ref, a_src_ref, a_dst_ref, z_ref, ed_ref, es_ref):
    z = jnp.dot(x_ref[...], w_ref[...], preferred_element_type=jnp.float32)
    z_ref[...] = z
    # per-head scalar logit contributions, [TM, H] each (tiny vs. the main matmul)
    ed_ref[...] = jnp.dot(z, a_dst_ref[...], preferred_element_type=jnp.float32)
    es_ref[...] = jnp.dot(z, a_src_ref[...], preferred_element_type=jnp.float32)


# -----------------------------------------------------------------------------
# Kernel B: tiled masked softmax + aggregation with online (flash-style) softmax.
# Grid = (dest row tiles i [parallel], source col tiles j [arbitrary/reduction]).
# -----------------------------------------------------------------------------
def _gat_attn_kernel(ed_ref, es_t_ref, z_ref, adj_ref, out_ref,
                     m_sc, l_sc, acc_sc,
                     *, num_heads, out_dim, dz, dz_pad, fast_math):
    j = pl.program_id(1)
    nj = pl.num_programs(1)

    @pl.when(j == 0)
    def _():
        m_sc[...] = jnp.full_like(m_sc, MASK_NEG)
        l_sc[...] = jnp.zeros_like(l_sc)
        acc_sc[...] = jnp.zeros_like(acc_sc)

    # adjacency tile is int8 {0,1}; cast once and share across all heads.
    adj = adj_ref[...].astype(jnp.float32)          # [TM, TN]
    edge = adj > 0.0

    ed = ed_ref[...]                                # [TM, H]   destination contributions
    es = es_t_ref[...]                              # [H, TN]   source contributions (lane-major)
    z = z_ref[...]                                  # [TN, Dz_pad]
    if fast_math:
        z = z.astype(jnp.bfloat16)                  # bf16 MXU operands (v6e/v7x)

    for h in range(num_heads):                      # static unroll; adj tile amortised over heads
        e = ed[:, h:h + 1] + es[h:h + 1, :]         # [TM,1] + [1,TN] -> [TM,TN]
        e = jnp.where(e >= 0, e, NEG_SLOPE * e)     # leaky_relu
        e = jnp.where(edge, e, jnp.float32(MASK_NEG))

        m_prev = m_sc[h]                            # [TM, 1]
        m_new = jnp.maximum(m_prev, jnp.max(e, axis=1, keepdims=True))
        # masked entries: e - m_new is hugely negative -> exp underflows to 0;
        # the * adj makes them exactly 0 (also handles fully-masked rows).
        p = jnp.exp(e - m_new) * adj                # [TM, TN]
        scale = jnp.exp(m_prev - m_new)             # [TM, 1]

        l_sc[h] = scale * l_sc[h] + jnp.sum(p, axis=1, keepdims=True)
        zh = z[:, h * out_dim:(h + 1) * out_dim]    # [TN, out]
        if fast_math:
            p = p.astype(jnp.bfloat16)
        acc_sc[h] = scale * acc_sc[h] + jnp.dot(p, zh,
                                                preferred_element_type=jnp.float32)
        m_sc[h] = m_new

    @pl.when(j == nj - 1)
    def _():
        parts = []
        for h in range(num_heads):
            # Guard zero in-degree rows (padding rows / isolated nodes): there l == 0
            # and acc == 0, so clamping l yields a clean 0 output instead of NaN.
            # TODO(synk): DGL leaves zero-in-degree nodes untouched / errors; we emit 0.
            l = jnp.maximum(l_sc[h], jnp.float32(1e-20))
            inv_l = pl.reciprocal(l, approx=fast_math)
            parts.append((acc_sc[h] * inv_l).astype(out_ref.dtype))
        if dz_pad > dz:
            parts.append(jnp.zeros((out_ref.shape[0], dz_pad - dz), out_ref.dtype))
        out_ref[...] = jnp.concatenate(parts, axis=1)   # lane-dense [TM, Dz_pad] store


# -----------------------------------------------------------------------------
# Wrapper
# -----------------------------------------------------------------------------
def multi_head_gat_layer(x, w_heads, a_src, a_dst, adj, *,
                         merge="cat", tile_m=128, tile_n=128, fast_math=False):
    """x: [N, in_dim]; w_heads: [H, in_dim, out_dim]; a_src/a_dst: [H, out_dim];
    adj: [N, N] with adj[i, j] != 0 iff edge j -> i (row i = in-neighbours of i)."""
    n, in_dim = x.shape
    num_heads, _, out_dim = w_heads.shape
    dz = num_heads * out_dim
    dz_pad = _round_up(dz, 128)                      # lane-dense output width

    step = tile_m * tile_n // math.gcd(tile_m, tile_n)
    n_pad = _round_up(n, step)
    num_i = n_pad // tile_m
    num_j = n_pad // tile_n

    f32 = jnp.float32
    # --- parameter packing (tiny, O(in*H*out)) ---
    w_all = jnp.zeros((in_dim, dz_pad), f32)
    w_all = w_all.at[:, :dz].set(
        jnp.transpose(w_heads.astype(f32), (1, 0, 2)).reshape(in_dim, dz))
    a_src_m = jnp.zeros((dz_pad, num_heads), f32)
    a_dst_m = jnp.zeros((dz_pad, num_heads), f32)
    for h in range(num_heads):
        a_src_m = a_src_m.at[h * out_dim:(h + 1) * out_dim, h].set(a_src[h].astype(f32))
        a_dst_m = a_dst_m.at[h * out_dim:(h + 1) * out_dim, h].set(a_dst[h].astype(f32))

    # --- input padding: zero rows have no edges -> produce 0, sliced off at the end ---
    x_p = jnp.zeros((n_pad, in_dim), f32).at[:n, :].set(x.astype(f32))
    adj_p = jnp.zeros((n_pad, n_pad), jnp.int8).at[:n, :n].set((adj != 0).astype(jnp.int8))

    vmem_limit = 32 * 1024 * 1024                    # safe on v5e/v6e/v7x

    # ---------------- kernel A: projection ----------------
    proj_cost = pl.CostEstimate(
        flops=int(2 * n_pad * in_dim * dz_pad + 4 * n_pad * dz_pad * num_heads),
        transcendentals=0,
        bytes_accessed=int(4 * (n_pad * in_dim + in_dim * dz_pad + n_pad * dz_pad
                                + 2 * n_pad * num_heads + 2 * dz_pad * num_heads)))
    z, ed, es = pl.pallas_call(
        _proj_kernel,
        grid=(num_i,),
        in_specs=[
            pl.BlockSpec((tile_m, in_dim), lambda i: (i, 0)),
            pl.BlockSpec((in_dim, dz_pad), lambda i: (0, 0)),
            pl.BlockSpec((dz_pad, num_heads), lambda i: (0, 0)),
            pl.BlockSpec((dz_pad, num_heads), lambda i: (0, 0)),
        ],
        out_specs=(
            pl.BlockSpec((tile_m, dz_pad), lambda i: (i, 0)),
            pl.BlockSpec((tile_m, num_heads), lambda i: (i, 0)),
            pl.BlockSpec((tile_m, num_heads), lambda i: (i, 0)),
        ),
        out_shape=(
            jax.ShapeDtypeStruct((n_pad, dz_pad), f32),
            jax.ShapeDtypeStruct((n_pad, num_heads), f32),
            jax.ShapeDtypeStruct((n_pad, num_heads), f32),
        ),
        compiler_params=pltpu.CompilerParams(
            dimension_semantics=("parallel",), vmem_limit_bytes=vmem_limit),
        cost_estimate=proj_cost,
    )(x_p, w_all, a_src_m, a_dst_m)

    # lane-major source logits [H, N_pad]; tiny one-off relayout OUTSIDE the N^2 loop,
    # so kernel B never transposes an [N,1] column.
    es_t = jnp.transpose(es)

    # ---------------- kernel B: tiled attention + aggregation ----------------
    attn_cost = pl.CostEstimate(
        flops=int(2 * n_pad * n_pad * dz + 10 * num_heads * n_pad * n_pad),
        transcendentals=int(num_heads * n_pad * n_pad),
        bytes_accessed=int(n_pad * n_pad                      # int8 adjacency, read once
                           + 4 * num_i * n_pad * dz_pad       # z re-read per dest row tile
                           + 4 * n_pad * dz_pad               # output
                           + 4 * (num_i + 1) * n_pad * num_heads))
    kernel = functools.partial(_gat_attn_kernel, num_heads=num_heads, out_dim=out_dim,
                               dz=dz, dz_pad=dz_pad, fast_math=fast_math)
    out_p = pl.pallas_call(
        kernel,
        grid=(num_i, num_j),
        in_specs=[
            pl.BlockSpec((tile_m, num_heads), lambda i, j: (i, 0)),   # e_dst  [N,H]
            pl.BlockSpec((num_heads, tile_n), lambda i, j: (0, j)),   # e_src  [H,N] lane-major
            pl.BlockSpec((tile_n, dz_pad), lambda i, j: (j, 0)),      # z (source rows)
            pl.BlockSpec((tile_m, tile_n), lambda i, j: (i, j)),      # adjacency (int8)
        ],
        out_specs=pl.BlockSpec((tile_m, dz_pad), lambda i, j: (i, 0)),
        out_shape=jax.ShapeDtypeStruct((n_pad, dz_pad), f32),
        scratch_shapes=[
            pltpu.VMEM((num_heads, tile_m, 1), f32),         # running max
            pltpu.VMEM((num_heads, tile_m, 1), f32),         # running sum
            pltpu.VMEM((num_heads, tile_m, out_dim), f32),   # running weighted sum
        ],
        compiler_params=pltpu.CompilerParams(
            dimension_semantics=("parallel", "arbitrary"),
            vmem_limit_bytes=vmem_limit),
        cost_estimate=attn_cost,
    )(ed, es_t, z, adj_p)

    out = out_p[:n, :dz]
    if merge == "cat":
        return out
    # MultiHeadGATLayer with merge != 'cat': torch.mean(torch.stack(head_outs)) -> scalar
    return jnp.mean(out)


# -----------------------------------------------------------------------------
# Pure-JAX reference (mirrors the PyTorch module head by head)
# -----------------------------------------------------------------------------
def reference(x, w_heads, a_src, a_dst, adj):
    mask = adj != 0
    outs = []
    for h in range(w_heads.shape[0]):
        z = x @ w_heads[h]
        e = (z @ a_dst[h][:, None]) + (z @ a_src[h][:, None]).T
        e = jnp.where(e >= 0, e, NEG_SLOPE * e)
        e = jnp.where(mask, e, MASK_NEG)
        m = jnp.max(e, axis=1, keepdims=True)
        p = jnp.exp(e - m) * mask
        alpha = p / jnp.sum(p, axis=1, keepdims=True)
        outs.append(alpha @ z)
    return jnp.concatenate(outs, axis=1)


if __name__ == "__main__":
    key = jax.random.PRNGKey(0)
    # N not a multiple of the tile (exercises padding); H*out = 128 (lane-dense output).
    N, IN_DIM, OUT_DIM, NUM_HEADS = 200, 16, 32, 4

    k_x, k_w, k_a, k_adj = jax.random.split(key, 4)

    x = jax.random.normal(k_x, (N, IN_DIM), dtype=jnp.float32)

    # per-head params matching nn.init.xavier_normal_(gain=calculate_gain('relu'))
    gain = jnp.sqrt(2.0)
    std_fc = gain * jnp.sqrt(2.0 / (IN_DIM + OUT_DIM))
    w_heads = std_fc * jax.random.normal(k_w, (NUM_HEADS, IN_DIM, OUT_DIM), dtype=jnp.float32)

    std_a = gain * jnp.sqrt(2.0 / (1 + 2 * OUT_DIM))
    a_full = std_a * jax.random.normal(k_a, (NUM_HEADS, 2 * OUT_DIM), dtype=jnp.float32)
    a_src = a_full[:, :OUT_DIM]   # applied to edge source z
    a_dst = a_full[:, OUT_DIM:]   # applied to edge destination z

    # adjacency: adj[i, j] = 1 iff edge j -> i; self-loops so every real node has >= 1 in-edge.
    adj = ((jax.random.uniform(k_adj, (N, N)) < 0.25)
           | jnp.eye(N, dtype=bool)).astype(jnp.int8)

    ref = reference(x, w_heads, a_src, a_dst, adj)

    # precise path: f32 MXU operands + exact reciprocal.  Tolerance allows for the
    # TPU default matmul precision used by the plain-JAX reference.
    out = multi_head_gat_layer(x, w_heads, a_src, a_dst, adj, fast_math=False)
    jax.block_until_ready(out)
    assert out.shape == (N, NUM_HEADS * OUT_DIM)
    assert jnp.allclose(out, ref, atol=2e-2, rtol=2e-2), float(jnp.max(jnp.abs(out - ref)))

    # fast path (v6e/v7x): bf16 MXU operands for alpha @ z + approx (EUP) reciprocal.
    out_fast = multi_head_gat_layer(x, w_heads, a_src, a_dst, adj, fast_math=True)
    jax.block_until_ready(out_fast)
    assert jnp.allclose(out_fast, ref, atol=5e-2, rtol=5e-2), float(jnp.max(jnp.abs(out_fast - ref)))

    print("KERNEL_OK")
</pallas_src>

<mosaic_0001>
module attributes {stable_mosaic.version = 11 : i64} {
  func.func @_proj_kernel(%arg0: i32, %arg1: memref<128x16xf32, #tpu.memory_space<vmem>>, %arg2: memref<16x128xf32, #tpu.memory_space<vmem>>, %arg3: memref<128x4xf32, #tpu.memory_space<vmem>>, %arg4: memref<128x4xf32, #tpu.memory_space<vmem>>, %arg5: memref<128x128xf32, #tpu.memory_space<vmem>>, %arg6: memref<128x4xf32, #tpu.memory_space<vmem>>, %arg7: memref<128x4xf32, #tpu.memory_space<vmem>>) attributes {dimension_semantics = [#tpu.dimension_semantics<parallel>], iteration_bounds = array<i64: 2>, scalar_prefetch = 0 : i64, scratch_operands = 0 : i64, tpu.core_type = #tpu.core_type<tc>, window_params = [{transform_indices = @transform_0, window_bounds = array<i64: 128, 16>}, {pipeline_mode = #tpu.pipeline_mode<synchronous>, transform_indices = @transform_1, window_bounds = array<i64: 16, 128>}, {pipeline_mode = #tpu.pipeline_mode<synchronous>, transform_indices = @transform_2, window_bounds = array<i64: 128, 4>}, {pipeline_mode = #tpu.pipeline_mode<synchronous>, transform_indices = @transform_3, window_bounds = array<i64: 128, 4>}, {transform_indices = @transform_4, window_bounds = array<i64: 128, 128>}, {transform_indices = @transform_5, window_bounds = array<i64: 128, 4>}, {transform_indices = @transform_6, window_bounds = array<i64: 128, 4>}]} {
    %c0 = arith.constant 0 : index
    %c0_0 = arith.constant 0 : index
    %0 = vector.load %arg1[%c0, %c0_0] : memref<128x16xf32, #tpu.memory_space<vmem>>, vector<128x16xf32>
    %c0_1 = arith.constant 0 : index
    %c0_2 = arith.constant 0 : index
    %1 = vector.load %arg2[%c0_1, %c0_2] : memref<16x128xf32, #tpu.memory_space<vmem>>, vector<16x128xf32>
    %cst = arith.constant dense<0.000000e+00> : vector<128x128xf32>
    %2 = tpu.matmul %0, %1, %cst {dimension_numbers = #tpu.dot_dimension_numbers<[1], [0], [0], [1], [0, 0, 1, 1], [], []>} : vector<128x16xf32>, vector<16x128xf32>, vector<128x128xf32> -> vector<128x128xf32>
    %c0_3 = arith.constant 0 : index
    %c0_4 = arith.constant 0 : index
    %3 = vector.load %arg5[%c0_3, %c0_4] : memref<128x128xf32, #tpu.memory_space<vmem>>, vector<128x128xf32>
    tpu.vector_store %arg5[%c0_3, %c0_4], %2 {strides = array<i32>} : memref<128x128xf32, #tpu.memory_space<vmem>>, vector<128x128xf32>,
    %c0_5 = arith.constant 0 : index
    %c0_6 = arith.constant 0 : index
    %4 = vector.load %arg4[%c0_5, %c0_6] : memref<128x4xf32, #tpu.memory_space<vmem>>, vector<128x4xf32>
    %cst_7 = arith.constant dense<0.000000e+00> : vector<128x4xf32>
    %5 = tpu.matmul %2, %4, %cst_7 {dimension_numbers = #tpu.dot_dimension_numbers<[1], [0], [0], [1], [0, 0, 1, 1], [], []>} : vector<128x128xf32>, vector<128x4xf32>, vector<128x4xf32> -> vector<128x4xf32>
    %c0_8 = arith.constant 0 : index
    %c0_9 = arith.constant 0 : index
    %6 = vector.load %arg6[%c0_8, %c0_9] : memref<128x4xf32, #tpu.memory_space<vmem>>, vector<128x4xf32>
    tpu.vector_store %arg6[%c0_8, %c0_9], %5 {strides = array<i32>} : memref<128x4xf32, #tpu.memory_space<vmem>>, vector<128x4xf32>,
    %c0_10 = arith.constant 0 : index
    %c0_11 = arith.constant 0 : index
    %7 = vector.load %arg3[%c0_10, %c0_11] : memref<128x4xf32, #tpu.memory_space<vmem>>, vector<128x4xf32>
    %cst_12 = arith.constant dense<0.000000e+00> : vector<128x4xf32>
    %8 = tpu.matmul %2, %7, %cst_12 {dimension_numbers = #tpu.dot_dimension_numbers<[1], [0], [0], [1], [0, 0, 1, 1], [], []>} : vector<128x128xf32>, vector<128x4xf32>, vector<128x4xf32> -> vector<128x4xf32>
    %c0_13 = arith.constant 0 : index
    %c0_14 = arith.constant 0 : index
    %9 = vector.load %arg7[%c0_13, %c0_14] : memref<128x4xf32, #tpu.memory_space<vmem>>, vector<128x4xf32>
    tpu.vector_store %arg7[%c0_13, %c0_14], %8 {strides = array<i32>} : memref<128x4xf32, #tpu.memory_space<vmem>>, vector<128x4xf32>,
    return
  }
  func.func @transform_0(%arg0: i32) -> (i32, i32) {
    %c0_i32 = arith.constant 0 : i32
    %c0_i32_0 = arith.constant 0 : i32
    return %arg0, %c0_i32 : i32, i32
  }
  func.func @transform_1(%arg0: i32) -> (i32, i32) {
    %c0_i32 = arith.constant 0 : i32
    %c0_i32_0 = arith.constant 0 : i32
    %c0_i32_1 = arith.constant 0 : i32
    return %c0_i32, %c0_i32_0 : i32, i32
  }
  func.func @transform_2(%arg0: i32) -> (i32, i32) {
    %c0_i32 = arith.constant 0 : i32
    %c0_i32_0 = arith.constant 0 : i32
    %c0_i32_1 = arith.constant 0 : i32
    return %c0_i32, %c0_i32_0 : i32, i32
  }
  func.func @transform_3(%arg0: i32) -> (i32, i32) {
    %c0_i32 = arith.constant 0 : i32
    %c0_i32_0 = arith.constant 0 : i32
    %c0_i32_1 = arith.constant 0 : i32
    return %c0_i32, %c0_i32_0 : i32, i32
  }
  func.func @transform_4(%arg0: i32) -> (i32, i32) {
    %c0_i32 = arith.constant 0 : i32
    %c0_i32_0 = arith.constant 0 : i32
    return %arg0, %c0_i32 : i32, i32
  }
  func.func @transform_5(%arg0: i32) -> (i32, i32) {
    %c0_i32 = arith.constant 0 : i32
    %c0_i32_0 = arith.constant 0 : i32
    return %arg0, %c0_i32 : i32, i32
  }
  func.func @transform_6(%arg0: i32) -> (i32, i32) {
    %c0_i32 = arith.constant 0 : i32
    %c0_i32_0 = arith.constant 0 : i32
    return %arg0, %c0_i32 : i32, i32
  }
}

</mosaic_0001>

<llo_original>
// kernel: tpu_custom_call.1
$region0: #{tpu_custom_call.1}
  #allocation0 [shape = 'u32[]', space=smem, size = 0x4, offset = 0x4, fixed_abs, tag = 'smem constant byte address 0x4 - core index']
  #allocation1 [shape = 'u32[144,128]{1,0:T(1,128)}', space=vmem, size = 0x12000, scoped, tag = 'internal scratch']
  %s0 = inlined_call_operand.vmem [shape: f32[256,16], index: 0, kind: input, shape index: {}]
  %s1 = inlined_call_operand.vmem [shape: f32[16,128], index: 1, kind: input, shape index: {}]
  %s2 = inlined_call_operand.vmem [shape: f32[128,4], index: 2, kind: input, shape index: {}]
  %s3 = inlined_call_operand.vmem [shape: f32[128,4], index: 3, kind: input, shape index: {}]
  %s4 = inlined_call_operand.hbm [shape: f32[256,128], index: 4, kind: output, shape index: {0}]
  %s5 = inlined_call_operand.vmem [shape: f32[256,4], index: 5, kind: output, shape index: {1}]
  %s6 = inlined_call_operand.vmem [shape: f32[256,4], index: 6, kind: output, shape index: {2}]
  %7 = xla_tuple %s4, %s5, %s6
  %s8 = sld [smem:[#allocation0]]
  $region65: #{tpu_custom_call.1} parent=0
    _
  %s10 = ssub.s32 1, %s8
  %s11 = scalar_select 0, %s10, %s8
  $region1: #{tpu_custom_call.1} parent=0
    #allocation2 [shape = 'u8[131072]{0}', space=vmem, size = 0x20000, scoped, tag = 'output window, operand 0']
    #allocation3 [shape = 's32[2]{0}', space=sflag, size = 0x8, scoped, tag = 'scoped memory for tpu_custom_call.1']
    %12 = vsyncpa [#allocation3], 0
    %s13 = scalar_lea.sflag [#allocation3], 1
    %14 = vsyncpa %s13, 0
    loop: start=0, step=1, limit=4
    $region2: #{tpu_custom_call.1} parent=1 // loop_pre_header
      _
    $region3: #{tpu_custom_call.1} parent=1 // loop_header
      %s16 = sphi 0, %s20
      %p17 = scmp.ge.s32.totalorder %s16, 4
      %s26 = sphi 0, %s28
      %s29 = sphi 0, %s26
      %s30 = sphi 0, %s29
      %s46 = sphi 0, %s30
      %s50 = sphi 0, %s50
      %s52 = sphi 0, %s50
      %s53 = sphi 0, %s52
      %s67 = sphi 0, %s53
      %s71 = sphi 0, %s71
      %s73 = sphi 0, %s71
      %s74 = sphi 0, %s73
      %s88 = sphi 0, %s74
      %s92 = sphi 0, %s92
      %s94 = sphi 0, %s92
      %s95 = sphi 0, %s94
      %s109 = sphi 0, %s95
      %s115 = sphi 0, %s117
      %s118 = sphi 0, %s115
      %s119 = sphi 0, %s118
      %s135 = sphi 0, %s119
      %s141 = sphi 0, %s143
      %s144 = sphi 0, %s141
      %s145 = sphi 0, %s144
      %s161 = sphi 0, %s145
      %s167 = sphi 0, %s169
      %s170 = sphi 0, %s167
      %s171 = sphi 0, %s170
      %s187 = sphi 0, %s171
    $region4: #{tpu_custom_call.1} parent=1 // loop_header_branch
      %19 = sbr.rel (%p17) target = $region8
    $region5: #{tpu_custom_call.1} parent=1 // loop_body
      %s21 = ssub.s32 %s16, 1
      %s22 = ssub.s32 %s16, 2
      %s23 = sadd.s32 %s16, 1
      %s24 = ssub.s32 %s16, %s23
      %p25 = scmp.eq.s32.totalorder %s24, 0
      %s27 = sadd.s32 %s26, 1
      %s28 = scalar_select %p25, %s26, %s27
      %p31 = pneg %p25
      %p32 = scmp.eq.s32.totalorder %s16, 1
      %p33 = por %p31, %p32
      %p34 = scmp.ne.s32.totalorder %s26, %s29
      %p35 = scmp.eq.s32.totalorder %s16, 0
      %p36 = por %p34, %p35
      %p37 = scmp.ne.s32.totalorder %s26, %s29
      %p38 = scmp.eq.s32.totalorder %s21, 1
      %p39 = por %p37, %p38
      %p40 = scmp.ne.s32.totalorder %s29, %s30
      %p41 = scmp.eq.s32.totalorder %s21, 0
      %p42 = por %p40, %p41
      %p43 = scmp.ne.s32.totalorder %s29, %s30
      %p44 = scmp.eq.s32.totalorder %s22, 1
      %p45 = por %p43, %p44
      %p47 = scmp.ne.s32.totalorder %s30, %s46
      %p48 = scmp.eq.s32.totalorder %s22, 0
      %p49 = por %p47, %p48
      %s51 = sadd.s32 %s50, 1
      %p54 = scmp.eq.s32.totalorder %s16, 1
      %p55 = scmp.ne.s32.totalorder %s50, %s52
      %p56 = scmp.eq.s32.totalorder %s16, 0
      %p57 = por %p55, %p56
      %p58 = scmp.ne.s32.totalorder %s50, %s52
      %p59 = scmp.eq.s32.totalorder %s21, 1
      %p60 = por %p58, %p59
      %p61 = scmp.ne.s32.totalorder %s52, %s53
      %p62 = scmp.eq.s32.totalorder %s21, 0
      %p63 = por %p61, %p62
      %p64 = scmp.ne.s32.totalorder %s52, %s53
      %p65 = scmp.eq.s32.totalorder %s22, 1
      %p66 = por %p64, %p65
      %p68 = scmp.ne.s32.totalorder %s53, %s67
      %p69 = scmp.eq.s32.totalorder %s22, 0
      %p70 = por %p68, %p69
      %s72 = sadd.s32 %s71, 1
      %p75 = scmp.eq.s32.totalorder %s16, 1
      %p76 = scmp.ne.s32.totalorder %s71, %s73
      %p77 = scmp.eq.s32.totalorder %s16, 0
      %p78 = por %p76, %p77
      %p79 = scmp.ne.s32.totalorder %s71, %s73
      %p80 = scmp.eq.s32.totalorder %s21, 1
      %p81 = por %p79, %p80
      %p82 = scmp.ne.s32.totalorder %s73, %s74
      %p83 = scmp.eq.s32.totalorder %s21, 0
      %p84 = por %p82, %p83
      %p85 = scmp.ne.s32.totalorder %s73, %s74
      %p86 = scmp.eq.s32.totalorder %s22, 1
      %p87 = por %p85, %p86
      %p89 = scmp.ne.s32.totalorder %s74, %s88
      %p90 = scmp.eq.s32.totalorder %s22, 0
      %p91 = por %p89, %p90
      %s93 = sadd.s32 %s92, 1
      %p96 = scmp.eq.s32.totalorder %s16, 1
      %p97 = scmp.ne.s32.totalorder %s92, %s94
      %p98 = scmp.eq.s32.totalorder %s16, 0
      %p99 = por %p97, %p98
      %p100 = scmp.ne.s32.totalorder %s92, %s94
      %p101 = scmp.eq.s32.totalorder %s21, 1
      %p102 = por %p100, %p101
      %p103 = scmp.ne.s32.totalorder %s94, %s95
      %p104 = scmp.eq.s32.totalorder %s21, 0
      %p105 = por %p103, %p104
      %p106 = scmp.ne.s32.totalorder %s94, %s95
      %p107 = scmp.eq.s32.totalorder %s22, 1
      %p108 = por %p106, %p107
      %p110 = scmp.ne.s32.totalorder %s95, %s109
      %p111 = scmp.eq.s32.totalorder %s22, 0
      %p112 = por %p110, %p111
      %s113 = ssub.s32 %s16, %s23
      %p114 = scmp.eq.s32.totalorder %s113, 0
      %s116 = sadd.s32 %s115, 1
      %s117 = scalar_select %p114, %s115, %s116
      %p120 = pneg %p114
      %p121 = scmp.eq.s32.totalorder %s16, 1
      %p122 = por %p120, %p121
      %p123 = scmp.ne.s32.totalorder %s115, %s118
      %p124 = scmp.eq.s32.totalorder %s16, 0
      %p125 = por %p123, %p124
      %p126 = scmp.ne.s32.totalorder %s115, %s118
      %p127 = scmp.eq.s32.totalorder %s21, 1
      %p128 = por %p126, %p127
      %p129 = scmp.ne.s32.totalorder %s118, %s119
      %p130 = scmp.eq.s32.totalorder %s21, 0
      %p131 = por %p129, %p130
      %p132 = scmp.ne.s32.totalorder %s118, %s119
      %p133 = scmp.eq.s32.totalorder %s22, 1
      %p134 = por %p132, %p133
      %p136 = scmp.ne.s32.totalorder %s119, %s135
      %p137 = scmp.eq.s32.totalorder %s22, 0
      %p138 = por %p136, %p137
      %s139 = ssub.s32 %s16, %s23
      %p140 = scmp.eq.s32.totalorder %s139, 0
      %s142 = sadd.s32 %s141, 1
      %s143 = scalar_select %p140, %s141, %s142
      %p146 = pneg %p140
      %p147 = scmp.eq.s32.totalorder %s16, 1
      %p148 = por %p146, %p147
      %p149 = scmp.ne.s32.totalorder %s141, %s144
      %p150 = scmp.eq.s32.totalorder %s16, 0
      %p151 = por %p149, %p150
      %p152 = scmp.ne.s32.totalorder %s141, %s144
      %p153 = scmp.eq.s32.totalorder %s21, 1
      %p154 = por %p152, %p153
      %p155 = scmp.ne.s32.totalorder %s144, %s145
      %p156 = scmp.eq.s32.totalorder %s21, 0
      %p157 = por %p155, %p156
      %p158 = scmp.ne.s32.totalorder %s144, %s145
      %p159 = scmp.eq.s32.totalorder %s22, 1
      %p160 = por %p158, %p159
      %p162 = scmp.ne.s32.totalorder %s145, %s161
      %p163 = scmp.eq.s32.totalorder %s22, 0
      %p164 = por %p162, %p163
      %s165 = ssub.s32 %s16, %s23
      %p166 = scmp.eq.s32.totalorder %s165, 0
      %s168 = sadd.s32 %s167, 1
      %s169 = scalar_select %p166, %s167, %s168
      %p172 = pneg %p166
      %p173 = scmp.eq.s32.totalorder %s16, 1
      %p174 = por %p172, %p173
      %p175 = scmp.ne.s32.totalorder %s167, %s170
      %p176 = scmp.eq.s32.totalorder %s16, 0
      %p177 = por %p175, %p176
      %p178 = scmp.ne.s32.totalorder %s167, %s170
      %p179 = scmp.eq.s32.totalorder %s21, 1
      %p180 = por %p178, %p179
      %p181 = scmp.ne.s32.totalorder %s170, %s171
      %p182 = scmp.eq.s32.totalorder %s21, 0
      %p183 = por %p181, %p182
      %p184 = scmp.ne.s32.totalorder %s170, %s171
      %p185 = scmp.eq.s32.totalorder %s22, 1
      %p186 = por %p184, %p185
      %p188 = scmp.ne.s32.totalorder %s171, %s187
      %p189 = scmp.eq.s32.totalorder %s22, 0
      %p190 = por %p188, %p189
      %p191 = scmp.le.s32.totalorder 1, %s16
      %p192 = scmp.lt.s32.totalorder %s16, 3
      %p193 = pnand %p191, %p192
      %p194 = pneg %p193
      // Predicated region
      $region9: #{tpu_custom_call.1} parent=5 // pred_check
        _
      $region10: #{tpu_custom_call.1} parent=5 // pred_check_branch
        %196 = sbr.rel (%p193) target = $region12
      $region11: #{tpu_custom_call.1} parent=5 // pred_region
        %s197 = ssub.s32 %s16, 1
        // Predicated region
        $region13: #{tpu_custom_call.1} parent=11 // pred_check
          %p198 = pneg %p63
        $region14: #{tpu_custom_call.1} parent=11 // pred_check_branch
          %200 = sbr.rel (%p198) target = $region16
        $region15: #{tpu_custom_call.1} parent=11 // pred_region
          _
        $region16: #{tpu_custom_call.1} parent=11 // pred_fallthru
          _
        // Predicated region
        $region17: #{tpu_custom_call.1} parent=11 // pred_check
          %p201 = pneg %p84
        $region18: #{tpu_custom_call.1} parent=11 // pred_check_branch
          %203 = sbr.rel (%p201) target = $region20
        $region19: #{tpu_custom_call.1} parent=11 // pred_region
          _
        $region20: #{tpu_custom_call.1} parent=11 // pred_fallthru
          _
        // Predicated region
        $region21: #{tpu_custom_call.1} parent=11 // pred_check
          %p204 = pneg %p105
        $region22: #{tpu_custom_call.1} parent=11 // pred_check_branch
          %206 = sbr.rel (%p204) target = $region24
        $region23: #{tpu_custom_call.1} parent=11 // pred_region
          _
        $region24: #{tpu_custom_call.1} parent=11 // pred_fallthru
          _
      $region12: #{tpu_custom_call.1} parent=5 // pred_fallthru
        _
      %p207 = scmp.lt.s32.totalorder %s16, 2
      // Predicated region
      $region25: #{tpu_custom_call.1} parent=5 // pred_check
        %p208 = pneg %p207
      $region26: #{tpu_custom_call.1} parent=5 // pred_check_branch
        %210 = sbr.rel (%p208) target = $region28
      $region27: #{tpu_custom_call.1} parent=5 // pred_region
        // Predicated region
        $region29: #{tpu_custom_call.1} parent=27 // pred_check
          %p211 = pneg %p36
        $region30: #{tpu_custom_call.1} parent=27 // pred_check_branch
          %213 = sbr.rel (%p211) target = $region32
        $region31: #{tpu_custom_call.1} parent=27 // pred_region
          %s214 = smul.u32 16, %s16
          %p215 = scmp.lt.s32.totalorder %s214, 31
          %s216 = scalar_select %p215, %s214, 31
          %s217 = smul.addr %s216, 8
          %s218 = scalar_lea.vmem %s0, %s217
          %s219 = smul.u32 16, %s16
        $region32: #{tpu_custom_call.1} parent=27 // pred_fallthru
          _
      $region28: #{tpu_custom_call.1} parent=5 // pred_fallthru
        _
      %p220 = scmp.le.s32.totalorder 1, %s16
      %p221 = scmp.lt.s32.totalorder %s16, 3
      %p222 = pnand %p220, %p221
      %p223 = pneg %p222
      // Predicated region
      $region33: #{tpu_custom_call.1} parent=5 // pred_check
        _
      $region34: #{tpu_custom_call.1} parent=5 // pred_check_branch
        %225 = sbr.rel (%p222) target = $region36
      $region35: #{tpu_custom_call.1} parent=5 // pred_region
        %s226 = ssub.s32 %s16, 1
        %s227 = smul.u32 16, %s21
        %p228 = scmp.lt.s32.totalorder %s227, 31
        %s229 = scalar_select %p228, %s227, 31
        %s230 = smul.addr %s229, 8
        %s231 = scalar_lea.vmem %s0, %s230
        %p232 = pneg %p42
        %p233 = pneg %p39
        %p234 = pneg %p63
        %p235 = pneg %p60
        %p236 = pneg %p84
        %p237 = pneg %p81
        %p238 = pneg %p105
        %p239 = pneg %p102
        %p240 = pneg %p131
        %p241 = pneg %p128
        %s242 = sand.u32 %s118, 1
        %s243 = scalar_lea.sflag [#allocation3], %s242
        %s244 = sand.u32 %s118, 1
        %s245 = smul.addr %s244, 128
        %s246 = scalar_lea.vmem [#allocation2], %s245
        %p247 = pneg %p157
        %p248 = pneg %p154
        %s249 = smul.u32 16, %s21
        %p250 = scmp.lt.s32.totalorder %s249, 31
        %s251 = scalar_select %p250, %s249, 31
        %s252 = smul.addr %s251, 8
        %s253 = scalar_lea.vmem %s5, %s252
        %p254 = pneg %p183
        %p255 = pneg %p180
        %s256 = smul.u32 16, %s21
        %p257 = scmp.lt.s32.totalorder %s256, 31
        %s258 = scalar_select %p257, %s256, 31
        %s259 = smul.addr %s258, 8
        %s260 = scalar_lea.vmem %s6, %s259
        %s261 = smul.u32 16, %s21
        %p262 = scmp.lt.s32.totalorder %s261, 31
        %s263 = scalar_select %p262, %s261, 31
        %s264 = smul.addr %s263, 8
        %s265 = scalar_lea.vmem %s0, %s264
        %s266 = smul.u32 16, %s21
        %s267 = smul.u32 16, %s21
        %s268 = smul.u32 16, %s21
        %p269 = scmp.lt.s32.totalorder %s268, 31
        %s270 = scalar_select %p269, %s268, 31
        %s271 = smul.addr %s270, 8
        %s272 = scalar_lea.vmem %s5, %s271
        %s273 = smul.u32 16, %s21
        %s274 = smul.u32 16, %s21
        %p275 = scmp.lt.s32.totalorder %s274, 31
        %s276 = scalar_select %p275, %s274, 31
        %s277 = smul.addr %s276, 8
        %s278 = scalar_lea.vmem %s6, %s277
        %s279 = smul.u32 16, %s21
        %v280 = vld [vmem:[%s265] sm:$0xff]
        %v281 = vld [vmem:[%s265 + $0x8] sm:$0xff]
        %v282 = vld [vmem:[%s265 + $0x10] sm:$0xff]
        %v283 = vld [vmem:[%s265 + $0x18] sm:$0xff]
        %v284 = vld [vmem:[%s265 + $0x20] sm:$0xff]
        %v285 = vld [vmem:[%s265 + $0x28] sm:$0xff]
        %v286 = vld [vmem:[%s265 + $0x30] sm:$0xff]
        %v287 = vld [vmem:[%s265 + $0x38] sm:$0xff]
        %v288 = vld [vmem:[%s265 + $0x40] sm:$0xff]
        %v289 = vld [vmem:[%s265 + $0x48] sm:$0xff]
        %v290 = vld [vmem:[%s265 + $0x50] sm:$0xff]
        %v291 = vld [vmem:[%s265 + $0x58] sm:$0xff]
        %v292 = vld [vmem:[%s265 + $0x60] sm:$0xff]
        %v293 = vld [vmem:[%s265 + $0x68] sm:$0xff]
        %v294 = vld [vmem:[%s265 + $0x70] sm:$0xff]
        %v295 = vld [vmem:[%s265 + $0x78] sm:$0xff]
        %v296 = vld [vmem:[%s1] sm:$0xff]
        %v297 = vld [vmem:[%s1 + $0x8] sm:$0xff]
        %vm298 = vcmask 130048
        %v300 = vsel %vm298, %v280, 0
        %v303 = vsel %vm298, %v281, 0
        %v306 = vsel %vm298, %v282, 0
        %v309 = vsel %vm298, %v283, 0
        %v312 = vsel %vm298, %v284, 0
        %v315 = vsel %vm298, %v285, 0
        %v318 = vsel %vm298, %v286, 0
        %v321 = vsel %vm298, %v287, 0
        %v324 = vsel %vm298, %v288, 0
        %v327 = vsel %vm298, %v289, 0
        %v330 = vsel %vm298, %v290, 0
        %v333 = vsel %vm298, %v291, 0
        %v336 = vsel %vm298, %v292, 0
        %v339 = vsel %vm298, %v293, 0
        %v342 = vsel %vm298, %v294, 0
        %v345 = vsel %vm298, %v295, 0
        %347 = vmatprep.subr.mxu0 0.0
        %348 = vmatpush1.msra.mxu0 0.0
        %349 = vmatprep.subr.mxu0 0.0
        %350 = vmatpush1.msra.mxu0 0.0
        %351 = vmatprep.subr.mxu0 0.0
        %352 = vmatpush1.msra.mxu0 0.0
        %353 = vmatprep.subr.mxu0 0.0
        %354 = vmatpush1.msra.mxu0 0.0
        %355 = vmatprep.subr.mxu0 0.0
        %356 = vmatpush1.msra.mxu0 0.0
        %357 = vmatprep.subr.mxu0 0.0
        %358 = vmatpush1.msra.mxu0 0.0
        %359 = vmatprep.subr.mxu0 0.0
        %360 = vmatpush1.msra.mxu0 0.0
        %361 = vmatprep.subr.mxu0 0.0
        %362 = vmatpush1.msra.mxu0 0.0
        %363 = vmatprep.subr.mxu0 0.0
        %364 = vmatpush1.msra.mxu0 0.0
        %365 = vmatprep.subr.mxu0 0.0
        %366 = vmatpush1.msra.mxu0 0.0
        %367 = vmatprep.subr.mxu0 0.0
        %368 = vmatpush1.msra.mxu0 0.0
        %369 = vmatprep.subr.mxu0 0.0
        %370 = vmatpush1.msra.mxu0 0.0
        %371 = vmatprep.subr.mxu0 0.0
        %372 = vmatpush1.msra.mxu0 0.0
        %373 = vmatprep.subr.mxu0 0.0
        %374 = vmatpush1.msra.mxu0 0.0
        %375 = vmatprep.subr.mxu0 0.0
        %376 = vmatpush1.msra.mxu0 %v297
        %377 = vmatprep.subr.mxu0 0.0
        %378 = vmatpush1.msra.mxu0 %v296
        %379 = vmatprep.subr.mxu0 0.0
        %380 = vmatpush2.msra.mxu0 0.0
        %381 = vmatprep.subr.mxu0 0.0
        %382 = vmatpush2.msra.mxu0 0.0
        %383 = vmatprep.subr.mxu0 0.0
        %384 = vmatpush2.msra.mxu0 0.0
        %385 = vmatprep.subr.mxu0 0.0
        %386 = vmatpush2.msra.mxu0 0.0
        %387 = vmatprep.subr.mxu0 0.0
        %388 = vmatpush2.msra.mxu0 0.0
        %389 = vmatprep.subr.mxu0 0.0
        %390 = vmatpush2.msra.mxu0 0.0
        %391 = vmatprep.subr.mxu0 0.0
        %392 = vmatpush2.msra.mxu0 0.0
        %393 = vmatprep.subr.mxu0 0.0
        %394 = vmatpush2.msra.mxu0 0.0
        %395 = vmatprep.subr.mxu0 0.0
        %396 = vmatpush2.msra.mxu0 0.0
        %397 = vmatprep.subr.mxu0 0.0
        %398 = vmatpush2.msra.mxu0 0.0
        %399 = vmatprep.subr.mxu0 0.0
        %400 = vmatpush2.msra.mxu0 0.0
        %401 = vmatprep.subr.mxu0 0.0
        %402 = vmatpush2.msra.mxu0 0.0
        %403 = vmatprep.subr.mxu0 0.0
        %404 = vmatpush2.msra.mxu0 0.0
        %405 = vmatprep.subr.mxu0 0.0
        %406 = vmatpush2.msra.mxu0 0.0
        %407 = vmatprep.subr.mxu0 0.0
        %408 = vmatpush2.msra.mxu0 0.0
        %409 = vmatprep.subr.mxu0 0.0
        %410 = vmatpush2.msra.mxu0 0.0
        %411 = vmatprep.mubr.f32.mxu0 0.0
        %412 = vmatmul.mubr.f32.gmra.mxu0 %v300
        %v413 = vpop.f32.mrf.mxu0
        %v414 = vadd.f32 0.0, %v413
        %v415 = vpop.f32.mrf.mxu0
        %416 = vmatprep.mubr.f32.mxu0 0.0
        %417 = vmatmul.mubr.f32.gmra.mxu0 %v303
        %v418 = vpop.f32.mrf.mxu0
        %v419 = vadd.f32 0.0, %v418
        %v420 = vpop.f32.mrf.mxu0
        %421 = vmatprep.mubr.f32.mxu0 0.0
        %422 = vmatmul.mubr.f32.gmra.mxu0 %v306
        %v423 = vpop.f32.mrf.mxu0
        %v424 = vadd.f32 0.0, %v423
        %v425 = vpop.f32.mrf.mxu0
        %426 = vmatprep.mubr.f32.mxu0 0.0
        %427 = vmatmul.mubr.f32.gmra.mxu0 %v309
        %v428 = vpop.f32.mrf.mxu0
        %v429 = vadd.f32 0.0, %v428
        %v430 = vpop.f32.mrf.mxu0
        %431 = vmatprep.mubr.f32.mxu0 0.0
        %432 = vmatmul.mubr.f32.gmra.mxu0 %v312
        %v433 = vpop.f32.mrf.mxu0
        %v434 = vadd.f32 0.0, %v433
        %v435 = vpop.f32.mrf.mxu0
        %436 = vmatprep.mubr.f32.mxu0 0.0
        %437 = vmatmul.mubr.f32.gmra.mxu0 %v315
        %v438 = vpop.f32.mrf.mxu0
        %v439 = vadd.f32 0.0, %v438
        %v440 = vpop.f32.mrf.mxu0
        %441 = vmatprep.mubr.f32.mxu0 0.0
        %442 = vmatmul.mubr.f32.gmra.mxu0 %v318
        %v443 = vpop.f32.mrf.mxu0
        %v444 = vadd.f32 0.0, %v443
        %v445 = vpop.f32.mrf.mxu0
        %446 = vmatprep.mubr.f32.mxu0 0.0
        %447 = vmatmul.mubr.f32.gmra.mxu0 %v321
        %v448 = vpop.f32.mrf.mxu0
        %v449 = vadd.f32 0.0, %v448
        %v450 = vpop.f32.mrf.mxu0
        %451 = vmatprep.mubr.f32.mxu0 0.0
        %452 = vmatmul.mubr.f32.gmra.mxu0 %v324
        %v453 = vpop.f32.mrf.mxu0
        %v454 = vadd.f32 0.0, %v453
        %v455 = vpop.f32.mrf.mxu0
        %456 = vmatprep.mubr.f32.mxu0 0.0
        %457 = vmatmul.mubr.f32.gmra.mxu0 %v327
        %v458 = vpop.f32.mrf.mxu0
        %v459 = vadd.f32 0.0, %v458
        %v460 = vpop.f32.mrf.mxu0
        %461 = vmatprep.mubr.f32.mxu0 0.0
        %462 = vmatmul.mubr.f32.gmra.mxu0 %v330
        %v463 = vpop.f32.mrf.mxu0
        %v464 = vadd.f32 0.0, %v463
        %v465 = vpop.f32.mrf.mxu0
        %466 = vmatprep.mubr.f32.mxu0 0.0
        %467 = vmatmul.mubr.f32.gmra.mxu0 %v333
        %v468 = vpop.f32.mrf.mxu0
        %v469 = vadd.f32 0.0, %v468
        %v470 = vpop.f32.mrf.mxu0
        %471 = vmatprep.mubr.f32.mxu0 0.0
        %472 = vmatmul.mubr.f32.gmra.mxu0 %v336
        %v473 = vpop.f32.mrf.mxu0
        %v474 = vadd.f32 0.0, %v473
        %v475 = vpop.f32.mrf.mxu0
        %476 = vmatprep.mubr.f32.mxu0 0.0
        %477 = vmatmul.mubr.f32.gmra.mxu0 %v339
        %v478 = vpop.f32.mrf.mxu0
        %v479 = vadd.f32 0.0, %v478
        %v480 = vpop.f32.mrf.mxu0
        %481 = vmatprep.mubr.f32.mxu0 0.0
        %482 = vmatmul.mubr.f32.gmra.mxu0 %v342
        %v483 = vpop.f32.mrf.mxu0
        %v484 = vadd.f32 0.0, %v483
        %v485 = vpop.f32.mrf.mxu0
        %486 = vmatprep.mubr.f32.mxu0 0.0
        %487 = vmatmul.mubr.f32.gmra.mxu0 %v345
        %v488 = vpop.f32.mrf.mxu0
        %v489 = vadd.f32 0.0, %v488
        %v490 = vpop.f32.mrf.mxu0
        %491 = vdwg.mxu0
        %492 = vst [vmem:[%s246] sm:$0xff] %v414
        %493 = vst [vmem:[%s246 + $0x8] sm:$0xff] %v419
        %494 = vst [vmem:[%s246 + $0x10] sm:$0xff] %v424
        %495 = vst [vmem:[%s246 + $0x18] sm:$0xff] %v429
        %496 = vst [vmem:[%s246 + $0x20] sm:$0xff] %v434
        %497 = vst [vmem:[%s246 + $0x28] sm:$0xff] %v439
        %498 = vst [vmem:[%s246 + $0x30] sm:$0xff] %v444
        %499 = vst [vmem:[%s246 + $0x38] sm:$0xff] %v449
        %500 = vst [vmem:[%s246 + $0x40] sm:$0xff] %v454
        %501 = vst [vmem:[%s246 + $0x48] sm:$0xff] %v459
        %502 = vst [vmem:[%s246 + $0x50] sm:$0xff] %v464
        %503 = vst [vmem:[%s246 + $0x58] sm:$0xff] %v469
        %504 = vst [vmem:[%s246 + $0x60] sm:$0xff] %v474
        %505 = vst [vmem:[%s246 + $0x68] sm:$0xff] %v479
        %506 = vst [vmem:[%s246 + $0x70] sm:$0xff] %v484
        %507 = vst [vmem:[%s246 + $0x78] sm:$0xff] %v489
        %v508 = vld [vmem:[%s3] sm:$0xff]
        %v509 = vld [vmem:[%s3 + $0x8] sm:$0xff]
        %v510 = vld [vmem:[%s3 + $0x10] sm:$0xff]
        %v511 = vld [vmem:[%s3 + $0x18] sm:$0xff]
        %v512 = vld [vmem:[%s3 + $0x20] sm:$0xff]
        %v513 = vld [vmem:[%s3 + $0x28] sm:$0xff]
        %v514 = vld [vmem:[%s3 + $0x30] sm:$0xff]
        %v515 = vld [vmem:[%s3 + $0x38] sm:$0xff]
        %v516 = vld [vmem:[%s3 + $0x40] sm:$0xff]
        %v517 = vld [vmem:[%s3 + $0x48] sm:$0xff]
        %v518 = vld [vmem:[%s3 + $0x50] sm:$0xff]
        %v519 = vld [vmem:[%s3 + $0x58] sm:$0xff]
        %v520 = vld [vmem:[%s3 + $0x60] sm:$0xff]
        %v521 = vld [vmem:[%s3 + $0x68] sm:$0xff]
        %v522 = vld [vmem:[%s3 + $0x70] sm:$0xff]
        %v523 = vld [vmem:[%s3 + $0x78] sm:$0xff]
        %524 = vmatprep.subr.mxu0 0.0
        %525 = vmatpush1.msra.mxu0 %v523
        %526 = vmatprep.subr.mxu0 0.0
        %527 = vmatpush1.msra.mxu0 %v522
        %528 = vmatprep.subr.mxu0 0.0
        %529 = vmatpush1.msra.mxu0 %v521
        %530 = vmatprep.subr.mxu0 0.0
        %531 = vmatpush1.msra.mxu0 %v520
        %532 = vmatprep.subr.mxu0 0.0
        %533 = vmatpush1.msra.mxu0 %v519
        %534 = vmatprep.subr.mxu0 0.0
        %535 = vmatpush1.msra.mxu0 %v518
        %536 = vmatprep.subr.mxu0 0.0
        %537 = vmatpush1.msra.mxu0 %v517
        %538 = vmatprep.subr.mxu0 0.0
        %539 = vmatpush1.msra.mxu0 %v516
        %540 = vmatprep.subr.mxu0 0.0
        %541 = vmatpush1.msra.mxu0 %v515
        %542 = vmatprep.subr.mxu0 0.0
        %543 = vmatpush1.msra.mxu0 %v514
        %544 = vmatprep.subr.mxu0 0.0
        %545 = vmatpush1.msra.mxu0 %v513
        %546 = vmatprep.subr.mxu0 0.0
        %547 = vmatpush1.msra.mxu0 %v512
        %548 = vmatprep.subr.mxu0 0.0
        %549 = vmatpush1.msra.mxu0 %v511
        %550 = vmatprep.subr.mxu0 0.0
        %551 = vmatpush1.msra.mxu0 %v510
        %552 = vmatprep.subr.mxu0 0.0
        %553 = vmatpush1.msra.mxu0 %v509
        %554 = vmatprep.subr.mxu0 0.0
        %555 = vmatpush1.msra.mxu0 %v508
        %556 = vmatprep.subr.mxu0 0.0
        %557 = vmatpush2.msra.mxu0 0.0
        %558 = vmatprep.subr.mxu0 0.0
        %559 = vmatpush2.msra.mxu0 0.0
        %560 = vmatprep.subr.mxu0 0.0
        %561 = vmatpush2.msra.mxu0 0.0
        %562 = vmatprep.subr.mxu0 0.0
        %563 = vmatpush2.msra.mxu0 0.0
        %564 = vmatprep.subr.mxu0 0.0
        %565 = vmatpush2.msra.mxu0 0.0
        %566 = vmatprep.subr.mxu0 0.0
        %567 = vmatpush2.msra.mxu0 0.0
        %568 = vmatprep.subr.mxu0 0.0
        %569 = vmatpush2.msra.mxu0 0.0
        %570 = vmatprep.subr.mxu0 0.0
        %571 = vmatpush2.msra.mxu0 0.0
        %572 = vmatprep.subr.mxu0 0.0
        %573 = vmatpush2.msra.mxu0 0.0
        %574 = vmatprep.subr.mxu0 0.0
        %575 = vmatpush2.msra.mxu0 0.0
        %576 = vmatprep.subr.mxu0 0.0
        %577 = vmatpush2.msra.mxu0 0.0
        %578 = vmatprep.subr.mxu0 0.0
        %579 = vmatpush2.msra.mxu0 0.0
        %580 = vmatprep.subr.mxu0 0.0
        %581 = vmatpush2.msra.mxu0 0.0
        %582 = vmatprep.subr.mxu0 0.0
        %583 = vmatpush2.msra.mxu0 0.0
        %584 = vmatprep.subr.mxu0 0.0
        %585 = vmatpush2.msra.mxu0 0.0
        %586 = vmatprep.subr.mxu0 0.0
        %587 = vmatpush2.msra.mxu0 0.0
        %588 = vmatprep.mubr.f32.mxu0 0.0
        %589 = vmatmul.mubr.f32.gmra.mxu0 %v414
        %v590 = vpop.f32.mrf.mxu0
        %v591 = vadd.f32 0.0, %v590
        %v592 = vpop.f32.mrf.mxu0
        %593 = vmatprep.mubr.f32.mxu0 0.0
        %594 = vmatmul.mubr.f32.gmra.mxu0 %v419
        %v595 = vpop.f32.mrf.mxu0
        %v596 = vadd.f32 0.0, %v595
        %v597 = vpop.f32.mrf.mxu0
        %598 = vmatprep.mubr.f32.mxu0 0.0
        %599 = vmatmul.mubr.f32.gmra.mxu0 %v424
        %v600 = vpop.f32.mrf.mxu0
        %v601 = vadd.f32 0.0, %v600
        %v602 = vpop.f32.mrf.mxu0
        %603 = vmatprep.mubr.f32.mxu0 0.0
        %604 = vmatmul.mubr.f32.gmra.mxu0 %v429
        %v605 = vpop.f32.mrf.mxu0
        %v606 = vadd.f32 0.0, %v605
        %v607 = vpop.f32.mrf.mxu0
        %608 = vmatprep.mubr.f32.mxu0 0.0
        %609 = vmatmul.mubr.f32.gmra.mxu0 %v434
        %v610 = vpop.f32.mrf.mxu0
        %v611 = vadd.f32 0.0, %v610
        %v612 = vpop.f32.mrf.mxu0
        %613 = vmatprep.mubr.f32.mxu0 0.0
        %614 = vmatmul.mubr.f32.gmra.mxu0 %v439
        %v615 = vpop.f32.mrf.mxu0
        %v616 = vadd.f32 0.0, %v615
        %v617 = vpop.f32.mrf.mxu0
        %618 = vmatprep.mubr.f32.mxu0 0.0
        %619 = vmatmul.mubr.f32.gmra.mxu0 %v444
        %v620 = vpop.f32.mrf.mxu0
        %v621 = vadd.f32 0.0, %v620
        %v622 = vpop.f32.mrf.mxu0
        %623 = vmatprep.mubr.f32.mxu0 0.0
        %624 = vmatmul.mubr.f32.gmra.mxu0 %v449
        %v625 = vpop.f32.mrf.mxu0
        %v626 = vadd.f32 0.0, %v625
        %v627 = vpop.f32.mrf.mxu0
        %628 = vmatprep.mubr.f32.mxu0 0.0
        %629 = vmatmul.mubr.f32.gmra.mxu0 %v454
        %v630 = vpop.f32.mrf.mxu0
        %v631 = vadd.f32 0.0, %v630
        %v632 = vpop.f32.mrf.mxu0
        %633 = vmatprep.mubr.f32.mxu0 0.0
        %634 = vmatmul.mubr.f32.gmra.mxu0 %v459
        %v635 = vpop.f32.mrf.mxu0
        %v636 = vadd.f32 0.0, %v635
        %v637 = vpop.f32.mrf.mxu0
        %638 = vmatprep.mubr.f32.mxu0 0.0
        %639 = vmatmul.mubr.f32.gmra.mxu0 %v464
        %v640 = vpop.f32.mrf.mxu0
        %v641 = vadd.f32 0.0, %v640
        %v642 = vpop.f32.mrf.mxu0
        %643 = vmatprep.mubr.f32.mxu0 0.0
        %644 = vmatmul.mubr.f32.gmra.mxu0 %v469
        %v645 = vpop.f32.mrf.mxu0
        %v646 = vadd.f32 0.0, %v645
        %v647 = vpop.f32.mrf.mxu0
        %648 = vmatprep.mubr.f32.mxu0 0.0
        %649 = vmatmul.mubr.f32.gmra.mxu0 %v474
        %v650 = vpop.f32.mrf.mxu0
        %v651 = vadd.f32 0.0, %v650
        %v652 = vpop.f32.mrf.mxu0
        %653 = vmatprep.mubr.f32.mxu0 0.0
        %654 = vmatmul.mubr.f32.gmra.mxu0 %v479
        %v655 = vpop.f32.mrf.mxu0
        %v656 = vadd.f32 0.0, %v655
        %v657 = vpop.f32.mrf.mxu0
        %658 = vmatprep.mubr.f32.mxu0 0.0
        %659 = vmatmul.mubr.f32.gmra.mxu0 %v484
        %v660 = vpop.f32.mrf.mxu0
        %v661 = vadd.f32 0.0, %v660
        %v662 = vpop.f32.mrf.mxu0
        %663 = vmatprep.mubr.f32.mxu0 0.0
        %664 = vmatmul.mubr.f32.gmra.mxu0 %v489
        %v665 = vpop.f32.mrf.mxu0
        %v666 = vadd.f32 0.0, %v665
        %v667 = vpop.f32.mrf.mxu0
        %668 = vdwg.mxu0
        %vm669 = vcmask 31744
        %670 = vst.msk [vmem:[%s272] sm:$0xff] %vm669, %v591
        %671 = vst.msk [vmem:[%s272 + $0x8] sm:$0xff] %vm669, %v596
        %672 = vst.msk [vmem:[%s272 + $0x10] sm:$0xff] %vm669, %v601
        %673 = vst.msk [vmem:[%s272 + $0x18] sm:$0xff] %vm669, %v606
        %674 = vst.msk [vmem:[%s272 + $0x20] sm:$0xff] %vm669, %v611
        %675 = vst.msk [vmem:[%s272 + $0x28] sm:$0xff] %vm669, %v616
        %676 = vst.msk [vmem:[%s272 + $0x30] sm:$0xff] %vm669, %v621
        %677 = vst.msk [vmem:[%s272 + $0x38] sm:$0xff] %vm669, %v626
        %678 = vst.msk [vmem:[%s272 + $0x40] sm:$0xff] %vm669, %v631
        %679 = vst.msk [vmem:[%s272 + $0x48] sm:$0xff] %vm669, %v636
        %680 = vst.msk [vmem:[%s272 + $0x50] sm:$0xff] %vm669, %v641
        %681 = vst.msk [vmem:[%s272 + $0x58] sm:$0xff] %vm669, %v646
        %682 = vst.msk [vmem:[%s272 + $0x60] sm:$0xff] %vm669, %v651
        %683 = vst.msk [vmem:[%s272 + $0x68] sm:$0xff] %vm669, %v656
        %684 = vst.msk [vmem:[%s272 + $0x70] sm:$0xff] %vm669, %v661
        %685 = vst.msk [vmem:[%s272 + $0x78] sm:$0xff] %vm669, %v666
        %v686 = vld [vmem:[%s2] sm:$0xff]
        %v687 = vld [vmem:[%s2 + $0x8] sm:$0xff]
        %v688 = vld [vmem:[%s2 + $0x10] sm:$0xff]
        %v689 = vld [vmem:[%s2 + $0x18] sm:$0xff]
        %v690 = vld [vmem:[%s2 + $0x20] sm:$0xff]
        %v691 = vld [vmem:[%s2 + $0x28] sm:$0xff]
        %v692 = vld [vmem:[%s2 + $0x30] sm:$0xff]
        %v693 = vld [vmem:[%s2 + $0x38] sm:$0xff]
        %v694 = vld [vmem:[%s2 + $0x40] sm:$0xff]
        %v695 = vld [vmem:[%s2 + $0x48] sm:$0xff]
        %v696 = vld [vmem:[%s2 + $0x50] sm:$0xff]
        %v697 = vld [vmem:[%s2 + $0x58] sm:$0xff]
        %v698 = vld [vmem:[%s2 + $0x60] sm:$0xff]
        %v699 = vld [vmem:[%s2 + $0x68] sm:$0xff]
        %v700 = vld [vmem:[%s2 + $0x70] sm:$0xff]
        %v701 = vld [vmem:[%s2 + $0x78] sm:$0xff]
        %702 = vmatprep.subr.mxu0 0.0
        %703 = vmatpush1.msra.mxu0 %v701
        %704 = vmatprep.subr.mxu0 0.0
        %705 = vmatpush1.msra.mxu0 %v700
        %706 = vmatprep.subr.mxu0 0.0
        %707 = vmatpush1.msra.mxu0 %v699
        %708 = vmatprep.subr.mxu0 0.0
        %709 = vmatpush1.msra.mxu0 %v698
        %710 = vmatprep.subr.mxu0 0.0
        %711 = vmatpush1.msra.mxu0 %v697
        %712 = vmatprep.subr.mxu0 0.0
        %713 = vmatpush1.msra.mxu0 %v696
        %714 = vmatprep.subr.mxu0 0.0
        %715 = vmatpush1.msra.mxu0 %v695
        %716 = vmatprep.subr.mxu0 0.0
        %717 = vmatpush1.msra.mxu0 %v694
        %718 = vmatprep.subr.mxu0 0.0
        %719 = vmatpush1.msra.mxu0 %v693
        %720 = vmatprep.subr.mxu0 0.0
        %721 = vmatpush1.msra.mxu0 %v692
        %722 = vmatprep.subr.mxu0 0.0
        %723 = vmatpush1.msra.mxu0 %v691
        %724 = vmatprep.subr.mxu0 0.0
        %725 = vmatpush1.msra.mxu0 %v690
        %726 = vmatprep.subr.mxu0 0.0
        %727 = vmatpush1.msra.mxu0 %v689
        %728 = vmatprep.subr.mxu0 0.0
        %729 = vmatpush1.msra.mxu0 %v688
        %730 = vmatprep.subr.mxu0 0.0
        %731 = vmatpush1.msra.mxu0 %v687
        %732 = vmatprep.subr.mxu0 0.0
        %733 = vmatpush1.msra.mxu0 %v686
        %734 = vmatprep.subr.mxu0 0.0
        %735 = vmatpush2.msra.mxu0 0.0
        %736 = vmatprep.subr.mxu0 0.0
        %737 = vmatpush2.msra.mxu0 0.0
        %738 = vmatprep.subr.mxu0 0.0
        %739 = vmatpush2.msra.mxu0 0.0
        %740 = vmatprep.subr.mxu0 0.0
        %741 = vmatpush2.msra.mxu0 0.0
        %742 = vmatprep.subr.mxu0 0.0
        %743 = vmatpush2.msra.mxu0 0.0
        %744 = vmatprep.subr.mxu0 0.0
        %745 = vmatpush2.msra.mxu0 0.0
        %746 = vmatprep.subr.mxu0 0.0
        %747 = vmatpush2.msra.mxu0 0.0
        %748 = vmatprep.subr.mxu0 0.0
        %749 = vmatpush2.msra.mxu0 0.0
        %750 = vmatprep.subr.mxu0 0.0
        %751 = vmatpush2.msra.mxu0 0.0
        %752 = vmatprep.subr.mxu0 0.0
        %753 = vmatpush2.msra.mxu0 0.0
        %754 = vmatprep.subr.mxu0 0.0
        %755 = vmatpush2.msra.mxu0 0.0
        %756 = vmatprep.subr.mxu0 0.0
        %757 = vmatpush2.msra.mxu0 0.0
        %758 = vmatprep.subr.mxu0 0.0
        %759 = vmatpush2.msra.mxu0 0.0
        %760 = vmatprep.subr.mxu0 0.0
        %761 = vmatpush2.msra.mxu0 0.0
        %762 = vmatprep.subr.mxu0 0.0
        %763 = vmatpush2.msra.mxu0 0.0
        %764 = vmatprep.subr.mxu0 0.0
        %765 = vmatpush2.msra.mxu0 0.0
        %766 = vmatprep.mubr.f32.mxu0 0.0
        %767 = vmatmul.mubr.f32.gmra.mxu0 %v414
        %v768 = vpop.f32.mrf.mxu0
        %v769 = vadd.f32 0.0, %v768
        %v770 = vpop.f32.mrf.mxu0
        %771 = vmatprep.mubr.f32.mxu0 0.0
        %772 = vmatmul.mubr.f32.gmra.mxu0 %v419
        %v773 = vpop.f32.mrf.mxu0
        %v774 = vadd.f32 0.0, %v773
        %v775 = vpop.f32.mrf.mxu0
        %776 = vmatprep.mubr.f32.mxu0 0.0
        %777 = vmatmul.mubr.f32.gmra.mxu0 %v424
        %v778 = vpop.f32.mrf.mxu0
        %v779 = vadd.f32 0.0, %v778
        %v780 = vpop.f32.mrf.mxu0
        %781 = vmatprep.mubr.f32.mxu0 0.0
        %782 = vmatmul.mubr.f32.gmra.mxu0 %v429
        %v783 = vpop.f32.mrf.mxu0
        %v784 = vadd.f32 0.0, %v783
        %v785 = vpop.f32.mrf.mxu0
        %786 = vmatprep.mubr.f32.mxu0 0.0
        %787 = vmatmul.mubr.f32.gmra.mxu0 %v434
        %v788 = vpop.f32.mrf.mxu0
        %v789 = vadd.f32 0.0, %v788
        %v790 = vpop.f32.mrf.mxu0
        %791 = vmatprep.mubr.f32.mxu0 0.0
        %792 = vmatmul.mubr.f32.gmra.mxu0 %v439
        %v793 = vpop.f32.mrf.mxu0
        %v794 = vadd.f32 0.0, %v793
        %v795 = vpop.f32.mrf.mxu0
        %796 = vmatprep.mubr.f32.mxu0 0.0
        %797 = vmatmul.mubr.f32.gmra.mxu0 %v444
        %v798 = vpop.f32.mrf.mxu0
        %v799 = vadd.f32 0.0, %v798
        %v800 = vpop.f32.mrf.mxu0
        %801 = vmatprep.mubr.f32.mxu0 0.0
        %802 = vmatmul.mubr.f32.gmra.mxu0 %v449
        %v803 = vpop.f32.mrf.mxu0
        %v804 = vadd.f32 0.0, %v803
        %v805 = vpop.f32.mrf.mxu0
        %806 = vmatprep.mubr.f32.mxu0 0.0
        %807 = vmatmul.mubr.f32.gmra.mxu0 %v454
        %v808 = vpop.f32.mrf.mxu0
        %v809 = vadd.f32 0.0, %v808
        %v810 = vpop.f32.mrf.mxu0
        %811 = vmatprep.mubr.f32.mxu0 0.0
        %812 = vmatmul.mubr.f32.gmra.mxu0 %v459
        %v813 = vpop.f32.mrf.mxu0
        %v814 = vadd.f32 0.0, %v813
        %v815 = vpop.f32.mrf.mxu0
        %816 = vmatprep.mubr.f32.mxu0 0.0
        %817 = vmatmul.mubr.f32.gmra.mxu0 %v464
        %v818 = vpop.f32.mrf.mxu0
        %v819 = vadd.f32 0.0, %v818
        %v820 = vpop.f32.mrf.mxu0
        %821 = vmatprep.mubr.f32.mxu0 0.0
        %822 = vmatmul.mubr.f32.gmra.mxu0 %v469
        %v823 = vpop.f32.mrf.mxu0
        %v824 = vadd.f32 0.0, %v823
        %v825 = vpop.f32.mrf.mxu0
        %826 = vmatprep.mubr.f32.mxu0 0.0
        %827 = vmatmul.mubr.f32.gmra.mxu0 %v474
        %v828 = vpop.f32.mrf.mxu0
        %v829 = vadd.f32 0.0, %v828
        %v830 = vpop.f32.mrf.mxu0
        %831 = vmatprep.mubr.f32.mxu0 0.0
        %832 = vmatmul.mubr.f32.gmra.mxu0 %v479
        %v833 = vpop.f32.mrf.mxu0
        %v834 = vadd.f32 0.0, %v833
        %v835 = vpop.f32.mrf.mxu0
        %836 = vmatprep.mubr.f32.mxu0 0.0
        %837 = vmatmul.mubr.f32.gmra.mxu0 %v484
        %v838 = vpop.f32.mrf.mxu0
        %v839 = vadd.f32 0.0, %v838
        %v840 = vpop.f32.mrf.mxu0
        %841 = vmatprep.mubr.f32.mxu0 0.0
        %842 = vmatmul.mubr.f32.gmra.mxu0 %v489
        %v843 = vpop.f32.mrf.mxu0
        %v844 = vadd.f32 0.0, %v843
        %v845 = vpop.f32.mrf.mxu0
        %846 = vdwg.mxu0
        %847 = vst.msk [vmem:[%s278] sm:$0xff] %vm669, %v769
        %848 = vst.msk [vmem:[%s278 + $0x8] sm:$0xff] %vm669, %v774
        %849 = vst.msk [vmem:[%s278 + $0x10] sm:$0xff] %vm669, %v779
        %850 = vst.msk [vmem:[%s278 + $0x18] sm:$0xff] %vm669, %v784
        %851 = vst.msk [vmem:[%s278 + $0x20] sm:$0xff] %vm669, %v789
        %852 = vst.msk [vmem:[%s278 + $0x28] sm:$0xff] %vm669, %v794
        %853 = vst.msk [vmem:[%s278 + $0x30] sm:$0xff] %vm669, %v799
        %854 = vst.msk [vmem:[%s278 + $0x38] sm:$0xff] %vm669, %v804
        %855 = vst.msk [vmem:[%s278 + $0x40] sm:$0xff] %vm669, %v809
        %856 = vst.msk [vmem:[%s278 + $0x48] sm:$0xff] %vm669, %v814
        %857 = vst.msk [vmem:[%s278 + $0x50] sm:$0xff] %vm669, %v819
        %858 = vst.msk [vmem:[%s278 + $0x58] sm:$0xff] %vm669, %v824
        %859 = vst.msk [vmem:[%s278 + $0x60] sm:$0xff] %vm669, %v829
        %860 = vst.msk [vmem:[%s278 + $0x68] sm:$0xff] %vm669, %v834
        %861 = vst.msk [vmem:[%s278 + $0x70] sm:$0xff] %vm669, %v839
        %862 = vst.msk [vmem:[%s278 + $0x78] sm:$0xff] %vm669, %v844
        %s863 = sand.u32 %s118, 1
        %s864 = scalar_lea.sflag [#allocation3], %s863
        %s865 = sand.u32 %s118, 1
        %s866 = smul.addr %s865, 128
        %s867 = scalar_lea.vmem [#allocation2], %s866
        %s868 = smul.u32 16, %s21
        %p869 = scmp.lt.s32.totalorder %s868, 31
        %s870 = scalar_select %p869, %s868, 31
        %s871 = smul.addr %s870, 8
        %s872 = scalar_lea.vmem %s5, %s871
        %s873 = smul.u32 16, %s21
        %p874 = scmp.lt.s32.totalorder %s873, 31
        %s875 = scalar_select %p874, %s873, 31
        %s876 = smul.addr %s875, 8
        %s877 = scalar_lea.vmem %s6, %s876
        // Predicated region
        $region37: #{tpu_custom_call.1} parent=35 // pred_check
          %p878 = pneg %p128
        $region38: #{tpu_custom_call.1} parent=35 // pred_check_branch
          %880 = sbr.rel (%p878) target = $region40
        $region39: #{tpu_custom_call.1} parent=35 // pred_region
          %s881 = smul.u32 16, %s21
          %s883 = ssub.s32 2048, 2048
          %884 = vsyncadd %s864, %s883
          %s885 = smul.addr %s881, 128
          %s886 = scalar_lea.hbm %s4, %s885
          %s887 = sshll.u32 %s867, 4
          %s888 = int_to_ptr.vmem [resolvable:$true] %s887
          %893 = dma.vmem_to_hbm [thread:$0]  %s888, 2048, %s886, %s864, 128, 128, 8
        $region40: #{tpu_custom_call.1} parent=35 // pred_fallthru
          _
        // Predicated region
        $region41: #{tpu_custom_call.1} parent=35 // pred_check
          %p894 = pneg %p154
        $region42: #{tpu_custom_call.1} parent=35 // pred_check_branch
          %896 = sbr.rel (%p894) target = $region44
        $region43: #{tpu_custom_call.1} parent=35 // pred_region
          %s897 = smul.u32 16, %s21
        $region44: #{tpu_custom_call.1} parent=35 // pred_fallthru
          _
        // Predicated region
        $region45: #{tpu_custom_call.1} parent=35 // pred_check
          %p898 = pneg %p180
        $region46: #{tpu_custom_call.1} parent=35 // pred_check_branch
          %900 = sbr.rel (%p898) target = $region48
        $region47: #{tpu_custom_call.1} parent=35 // pred_region
          %s901 = smul.u32 16, %s21
        $region48: #{tpu_custom_call.1} parent=35 // pred_fallthru
          _
      $region36: #{tpu_custom_call.1} parent=5 // pred_fallthru
        _
      %p902 = scmp.le.s32.totalorder 2, %s16
      // Predicated region
      $region49: #{tpu_custom_call.1} parent=5 // pred_check
        %p903 = pneg %p902
      $region50: #{tpu_custom_call.1} parent=5 // pred_check_branch
        %905 = sbr.rel (%p903) target = $region52
      $region51: #{tpu_custom_call.1} parent=5 // pred_region
        %s906 = ssub.s32 %s16, 2
        // Predicated region
        $region53: #{tpu_custom_call.1} parent=51 // pred_check
          %p907 = pneg %p134
        $region54: #{tpu_custom_call.1} parent=51 // pred_check_branch
          %909 = sbr.rel (%p907) target = $region56
        $region55: #{tpu_custom_call.1} parent=51 // pred_region
          %s910 = sand.u32 %s119, 1
          %s911 = scalar_lea.sflag [#allocation3], %s910
          %s912 = sand.u32 %s119, 1
          %s913 = smul.addr %s912, 128
          %s914 = scalar_lea.vmem [#allocation2], %s913
          %915 = dma.done %s911, 2048
        $region56: #{tpu_custom_call.1} parent=51 // pred_fallthru
          _
        // Predicated region
        $region57: #{tpu_custom_call.1} parent=51 // pred_check
          %p916 = pneg %p160
        $region58: #{tpu_custom_call.1} parent=51 // pred_check_branch
          %918 = sbr.rel (%p916) target = $region60
        $region59: #{tpu_custom_call.1} parent=51 // pred_region
          %s919 = smul.u32 16, %s22
          %p920 = scmp.lt.s32.totalorder %s919, 31
          %s921 = scalar_select %p920, %s919, 31
          %s922 = smul.addr %s921, 8
          %s923 = scalar_lea.vmem %s5, %s922
        $region60: #{tpu_custom_call.1} parent=51 // pred_fallthru
          _
        // Predicated region
        $region61: #{tpu_custom_call.1} parent=51 // pred_check
          %p924 = pneg %p186
        $region62: #{tpu_custom_call.1} parent=51 // pred_check_branch
          %926 = sbr.rel (%p924) target = $region64
        $region63: #{tpu_custom_call.1} parent=51 // pred_region
          %s927 = smul.u32 16, %s22
          %p928 = scmp.lt.s32.totalorder %s927, 31
          %s929 = scalar_select %p928, %s927, 31
          %s930 = smul.addr %s929, 8
          %s931 = scalar_lea.vmem %s6, %s930
        $region64: #{tpu_custom_call.1} parent=51 // pred_fallthru
          _
      $region52: #{tpu_custom_call.1} parent=5 // pred_fallthru
        _
    $region6: #{tpu_custom_call.1} parent=1 // loop_footer
      %s20 = sadd.s32 1, %s16
    $region7: #{tpu_custom_call.1} parent=1 // loop_footer_branch
      %15 = sbr.rel target = $region3
    $region8: #{tpu_custom_call.1} parent=1 // loop_exit
      _
    %932 = vsyncpa [#allocation3], 1
    %s933 = scalar_lea.sflag [#allocation3], 1
    %934 = vsyncpa %s933, 1

</llo_original>
